<compile_context>
chip_gen: v7x
topology: tpu7x:2x2x1
jax: 0.10.0
libtpu: 0.0.40
codegen_flags: <defaults>
</compile_context>

<pallas_src>
import math
import jax
import jax.numpy as jnp
from jax.experimental import pallas as pl
from jax.experimental.pallas import tpu as pltpu

# ---- static configuration (matches basemodel defaults) ----------------------
LATENT = 2          # latent_size
HIDDEN = 128        # hidden width of the MLP enc/dec heads
SWITCH = 0.0        # self.switch  (must be 0.0 -> dec_var branch eliminated)
BETA = 1.0          # forward() default
EPSILON = 0.01      # forward() default
LOG2PI = math.log(2.0 * math.pi)
PACK = 8            # lanes of the packed small-output slab (== full minor dim)

assert SWITCH == 0.0, "kernel statically eliminates dec_var branch for switch==0"
# TODO(synk): if SWITCH != 0.0 the dec_var MLP + Normal(x_mu, sqrt(x_var+eps))
# likelihood would have to be reinstated in the kernel.


def _softplus(x):
    # numerically-stable softplus (matches torch.nn.Softplus semantics)
    return jnp.maximum(x, 0.0) + jnp.log(1.0 + jnp.exp(-jnp.abs(x)))


def _sigmoid(x):
    # sigmoid(x) = 0.5 * (tanh(x/2) + 1): routes to the EUP, no divide, no
    # exp overflow for large-magnitude inputs.
    return 0.5 * (jnp.tanh(0.5 * x) + 1.0)


def vae_forward_kernel(
    # inputs (per batch tile + VMEM-resident weights)
    x_ref, noise_ref,
    w1_ref, b1_ref,          # enc layer 1 (w1 in bf16)
    w2_ref, b2_ref,          # fused enc head -> [mu | var]   (f32)
    w3_ref, b3_ref,          # dec_mu layer 1 (tiny, f32)
    w4_ref, b4_ref,          # dec_mu layer 2 (w4 in bf16)
    # outputs
    xmu_ref,                 # (TB, D)    f32
    small_ref,               # (TB, PACK) f32 packed: [log_px, kl, z0, z1, zmu0, zmu1, zvar0, zvar1]
):
    x = x_ref[...]          # [TB, D] f32
    noise = noise_ref[...]  # [TB, L] f32, ~ N(0, 1)
    D = x.shape[-1]

    # ---------------- encoder: enc(x) -> (mu, softplus(var_head)) ------------
    h = jnp.dot(x.astype(jnp.bfloat16), w1_ref[...],
                preferred_element_type=jnp.float32) + b1_ref[...]
    h = jnp.maximum(h, 0.0)
    mu_var = jnp.dot(h, w2_ref[...],
                     preferred_element_type=jnp.float32) + b2_ref[...]   # [TB, 2L]
    z_mu = mu_var[:, :LATENT]
    z_var = _softplus(mu_var[:, LATENT:])

    # ---------------- q = Normal(z_mu, sqrt(z_var + eps)); z = rsample() -----
    q_std = jnp.sqrt(z_var + EPSILON)
    z = z_mu + q_std * noise

    # ---------------- decoder mean head ---------------------------------------
    # K=2 contraction done on the VPU: h_mu = z0*w3[0] + z1*w3[1] + b3
    w3 = w3_ref[...]                                          # [2, HIDDEN]
    h_mu = (z[:, 0:1] * w3[0:1, :]
            + z[:, 1:2] * w3[1:2, :]
            + b3_ref[...])
    h_mu = jnp.maximum(h_mu, 0.0)
    x_mu = _sigmoid(jnp.dot(h_mu.astype(jnp.bfloat16), w4_ref[...],
                            preferred_element_type=jnp.float32) + b4_ref[...])
    # x_var branch eliminated statically: switch == 0 -> x_var = 0.02**2 (wrapper)

    # ---------------- log-probabilities (Independent(..., 1) => sum last dim)
    # switch == 0.0  ->  p_dist = Independent(Normal(x_mu, 1.0), 1)
    resid = x - x_mu
    log_px = (-0.5 * jnp.sum(resid * resid, axis=-1, keepdims=True)
              - 0.5 * D * LOG2PI)
    # (z - z_mu) / q_std == noise exactly, so:
    log_q = (-0.5 * jnp.sum(noise * noise, axis=-1, keepdims=True)
             - jnp.sum(jnp.log(q_std), axis=-1, keepdims=True)
             - 0.5 * LATENT * LOG2PI)
    log_prior = (-0.5 * jnp.sum(z * z, axis=-1, keepdims=True)
                 - 0.5 * LATENT * LOG2PI)
    kl = log_q - log_prior

    # ---------------- write outputs -------------------------------------------
    xmu_ref[...] = x_mu
    # Single PACK=8 slab; one concatenate instead of eight 128-lane selects.
    small_ref[...] = jnp.concatenate([log_px, kl, z, z_mu, z_var], axis=-1)


def init_params(key, in_size, hidden, latent):
    """Deterministic torch.nn.Linear-style init (uniform +/- 1/sqrt(fan_in)).

    Large matmul weights (w1, w4) are stored in bf16 to halve HBM->VMEM DMA;
    the MXU still accumulates in f32.  dec_var weights are never materialized
    (switch == 0 => statically dead).

    Note (v6e/v7x): the enc matmul's K dim is `in_size`; 256 here is MXU-tile
    aligned.  For other image sizes, pad w1's K dim (and the flattened x) once
    at init rather than per-call if the kernel ever becomes compute-bound.
    """
    def lin(k, fan_in, fan_out):
        kw, kb = jax.random.split(k)
        bound = 1.0 / math.sqrt(fan_in)
        w = jax.random.uniform(kw, (fan_in, fan_out), jnp.float32, -bound, bound)
        b = jax.random.uniform(kb, (1, fan_out), jnp.float32, -bound, bound)
        return w, b

    ks = jax.random.split(key, 4)
    w1, b1 = lin(ks[0], in_size, hidden)          # enc layer 1
    w2, b2 = lin(ks[1], hidden, 2 * latent)       # fused enc head -> [mu | var]
    w3, b3 = lin(ks[2], latent, hidden)           # dec_mu layer 1
    w4, b4 = lin(ks[3], hidden, in_size)          # dec_mu layer 2

    return (w1.astype(jnp.bfloat16), b1,
            w2, b2,
            w3, b3,
            w4.astype(jnp.bfloat16), b4)


def vae_forward(x_nchw, params, noise):
    """Returns (elbo_mean, log_px, kl, x_mu, x_var, z, z_mu, z_var).

    x_var is the constant 0.02**2 (switch == 0) returned as a (1, 1)
    broadcastable array; broadcast lazily at the call site if a full
    per-pixel map is needed (avoids writing a B*D constant to HBM).
    """
    B = x_nchw.shape[0]
    D = int(math.prod(x_nchw.shape[1:]))
    x = x_nchw.reshape(B, D).astype(jnp.float32)
    noise = noise.astype(jnp.float32)

    # ---- batch tile selection --------------------------------------------------
    # HBM-bound kernel: big tiles amortize per-step overhead.  Dominant VMEM
    # users per grid step are the double-buffered (TB, D) f32 x and x_mu
    # streams; keep 2 streams x 2 buffers x TB*D*4 <= ~40 MiB so the tile also
    # fits v7x's 64 MiB physical VMEM with headroom.
    STREAM_BUDGET = 40 << 20
    tb_cap = max(8, (STREAM_BUDGET // (2 * 2 * 4 * D)) // 8 * 8)
    TB = min(512, tb_cap)
    if B <= TB:
        TB = B          # single block == full array dims (always a legal block)
    grid = (pl.cdiv(B, TB),)
    # No wrapper-side padding and no output slicing: Pallas masks the ragged
    # last block's writeback; tail rows are never observed.

    w1, b1, w2, b2, w3, b3, w4, b4 = params

    row = lambda i: (i, 0)      # batch-tiled arrays
    rep = lambda i: (0, 0)      # weights: constant block -> stay VMEM-resident

    in_specs = [
        pl.BlockSpec((TB, D), row),          # x
        pl.BlockSpec((TB, LATENT), row),     # noise
        pl.BlockSpec(w1.shape, rep), pl.BlockSpec(b1.shape, rep),
        pl.BlockSpec(w2.shape, rep), pl.BlockSpec(b2.shape, rep),
        pl.BlockSpec(w3.shape, rep), pl.BlockSpec(b3.shape, rep),
        pl.BlockSpec(w4.shape, rep), pl.BlockSpec(b4.shape, rep),
    ]
    out_specs = (
        pl.BlockSpec((TB, D), row),          # x_mu
        pl.BlockSpec((TB, PACK), row),       # packed small outputs
    )
    out_shape = (
        jax.ShapeDtypeStruct((B, D), jnp.float32),
        jax.ShapeDtypeStruct((B, PACK), jnp.float32),
    )

    # Explicit VMEM budget: double-buffered per-step tiles + (double-buffered)
    # resident weights, ~50% headroom for layout padding / epilogue temps,
    # capped at 48 MiB so it is valid on v7x (64 MiB physical) and above the
    # v5e 16 MiB default only as far as actually needed.
    per_step = TB * D * 4 + TB * LATENT * 4 + TB * D * 4 + TB * PACK * 4
    weight_bytes = (w1.size * 2 + b1.size * 4 + w2.size * 4 + b2.size * 4 +
                    w3.size * 4 + b3.size * 4 + w4.size * 2 + b4.size * 4)
    vmem_limit = int(1.5 * (2 * per_step + 2 * weight_bytes)) + (4 << 20)
    vmem_limit = max(16 << 20, min(vmem_limit, 48 << 20))

    x_mu, small = pl.pallas_call(
        vae_forward_kernel,
        grid=grid,
        in_specs=in_specs,
        out_specs=out_specs,
        out_shape=out_shape,
        compiler_params=pltpu.CompilerParams(
            dimension_semantics=("parallel",),
            vmem_limit_bytes=vmem_limit),
    )(x, noise, w1, b1, w2, b2, w3, b3, w4, b4)

    log_px = small[:, 0]
    kl = small[:, 1]
    z = small[:, 2:4]
    z_mu = small[:, 4:6]
    z_var = small[:, 6:8]

    # switch == 0.0: x_var = 0*dec_var(z) + 1*0.02**2 -> constant everywhere.
    x_var = jnp.full((1, 1), (1.0 - SWITCH) * (0.02 ** 2), jnp.float32)
    elbo_mean = jnp.mean(log_px - BETA * kl)
    return elbo_mean, log_px, kl, x_mu, x_var, z, z_mu, z_var


if __name__ == "__main__":
    key = jax.random.PRNGKey(0)
    k_param, k_x, k_noise = jax.random.split(key, 3)

    # in_size = (C, H, W) = (1, 16, 16)  ->  flattened feature dim 256
    B, C, H, W = 2, 1, 16, 16
    D = C * H * W

    params = init_params(k_param, D, HIDDEN, LATENT)
    x = jax.random.uniform(k_x, (B, C, H, W), jnp.float32)          # NCHW like PyTorch
    noise = jax.random.normal(k_noise, (B, LATENT), jnp.float32)    # rsample() noise

    out = vae_forward(x, params, noise)
    jax.block_until_ready(out)

    elbo_mean, log_px, kl, x_mu, x_var, z, z_mu, z_var = out
    assert log_px.shape == (B,) and kl.shape == (B,)
    assert x_mu.shape == (B, D)
    assert x_var.shape == (1, 1)
    assert abs(float(x_var[0, 0]) - 0.02 ** 2) < 1e-8
    assert z.shape == (B, LATENT) and z_mu.shape == (B, LATENT) and z_var.shape == (B, LATENT)
    assert bool(jnp.isfinite(elbo_mean))
    assert bool(jnp.all(jnp.isfinite(x_mu)))
    assert bool(jnp.all(jnp.isfinite(log_px))) and bool(jnp.all(jnp.isfinite(kl)))
    print("KERNEL_OK")
</pallas_src>

<mosaic_0001>
module attributes {stable_mosaic.version = 11 : i64} {
  func.func @vae_forward_kernel(%arg0: i32, %arg1: memref<2x256xf32, #tpu.memory_space<vmem>>, %arg2: memref<2x2xf32, #tpu.memory_space<vmem>>, %arg3: memref<256x128xbf16, #tpu.memory_space<vmem>>, %arg4: memref<1x128xf32, #tpu.memory_space<vmem>>, %arg5: memref<128x4xf32, #tpu.memory_space<vmem>>, %arg6: memref<1x4xf32, #tpu.memory_space<vmem>>, %arg7: memref<2x128xf32, #tpu.memory_space<vmem>>, %arg8: memref<1x128xf32, #tpu.memory_space<vmem>>, %arg9: memref<128x256xbf16, #tpu.memory_space<vmem>>, %arg10: memref<1x256xf32, #tpu.memory_space<vmem>>, %arg11: memref<2x256xf32, #tpu.memory_space<vmem>>, %arg12: memref<2x8xf32, #tpu.memory_space<vmem>>) attributes {dimension_semantics = [#tpu.dimension_semantics<parallel>], iteration_bounds = array<i64: 1>, scalar_prefetch = 0 : i64, scratch_operands = 0 : i64, tpu.core_type = #tpu.core_type<tc>, window_params = [{transform_indices = @transform_0, window_bounds = array<i64: 2, 256>}, {transform_indices = @transform_1, window_bounds = array<i64: 2, 2>}, {pipeline_mode = #tpu.pipeline_mode<synchronous>, transform_indices = @transform_2, window_bounds = array<i64: 256, 128>}, {pipeline_mode = #tpu.pipeline_mode<synchronous>, transform_indices = @transform_3, window_bounds = array<i64: 1, 128>}, {pipeline_mode = #tpu.pipeline_mode<synchronous>, transform_indices = @transform_4, window_bounds = array<i64: 128, 4>}, {pipeline_mode = #tpu.pipeline_mode<synchronous>, transform_indices = @transform_5, window_bounds = array<i64: 1, 4>}, {pipeline_mode = #tpu.pipeline_mode<synchronous>, transform_indices = @transform_6, window_bounds = array<i64: 2, 128>}, {pipeline_mode = #tpu.pipeline_mode<synchronous>, transform_indices = @transform_7, window_bounds = array<i64: 1, 128>}, {pipeline_mode = #tpu.pipeline_mode<synchronous>, transform_indices = @transform_8, window_bounds = array<i64: 128, 256>}, {pipeline_mode = #tpu.pipeline_mode<synchronous>, transform_indices = @transform_9, window_bounds = array<i64: 1, 256>}, {transform_indices = @transform_10, window_bounds = array<i64: 2, 256>}, {transform_indices = @transform_11, window_bounds = array<i64: 2, 8>}]} {
    %c0 = arith.constant 0 : index
    %c0_0 = arith.constant 0 : index
    %0 = vector.load %arg1[%c0, %c0_0] : memref<2x256xf32, #tpu.memory_space<vmem>>, vector<2x256xf32>
    %c0_1 = arith.constant 0 : index
    %c0_2 = arith.constant 0 : index
    %1 = vector.load %arg2[%c0_1, %c0_2] : memref<2x2xf32, #tpu.memory_space<vmem>>, vector<2x2xf32>
    %2 = arith.truncf %0 : vector<2x256xf32> to vector<2x256xbf16>
    %c0_3 = arith.constant 0 : index
    %c0_4 = arith.constant 0 : index
    %3 = vector.load %arg3[%c0_3, %c0_4] : memref<256x128xbf16, #tpu.memory_space<vmem>>, vector<256x128xbf16>
    %cst = arith.constant dense<0.000000e+00> : vector<2x128xf32>
    %4 = tpu.matmul %2, %3, %cst {dimension_numbers = #tpu.dot_dimension_numbers<[1], [0], [0], [1], [0, 0, 1, 1], [], []>} : vector<2x256xbf16>, vector<256x128xbf16>, vector<2x128xf32> -> vector<2x128xf32>
    %c0_5 = arith.constant 0 : index
    %c0_6 = arith.constant 0 : index
    %5 = vector.load %arg4[%c0_5, %c0_6] : memref<1x128xf32, #tpu.memory_space<vmem>>, vector<1x128xf32>
    %6 = vector.broadcast %5 : vector<1x128xf32> to vector<2x128xf32>
    %7 = arith.addf %4, %6 : vector<2x128xf32>
    %cst_7 = arith.constant 0.000000e+00 : f32
    %8 = vector.broadcast %cst_7 : f32 to vector<2x128xf32>
    %9 = arith.maximumf %7, %8 : vector<2x128xf32>
    %c0_8 = arith.constant 0 : index
    %c0_9 = arith.constant 0 : index
    %10 = vector.load %arg5[%c0_8, %c0_9] : memref<128x4xf32, #tpu.memory_space<vmem>>, vector<128x4xf32>
    %cst_10 = arith.constant dense<0.000000e+00> : vector<2x4xf32>
    %11 = tpu.matmul %9, %10, %cst_10 {dimension_numbers = #tpu.dot_dimension_numbers<[1], [0], [0], [1], [0, 0, 1, 1], [], []>} : vector<2x128xf32>, vector<128x4xf32>, vector<2x4xf32> -> vector<2x4xf32>
    %c0_11 = arith.constant 0 : index
    %c0_12 = arith.constant 0 : index
    %12 = vector.load %arg6[%c0_11, %c0_12] : memref<1x4xf32, #tpu.memory_space<vmem>>, vector<1x4xf32>
    %13 = vector.broadcast %12 : vector<1x4xf32> to vector<2x4xf32>
    %14 = arith.addf %11, %13 : vector<2x4xf32>
    %15 = vector.extract_strided_slice %14 {offsets = [0, 0], sizes = [2, 2], strides = [1, 1]} : vector<2x4xf32> to vector<2x2xf32>
    %16 = vector.extract_strided_slice %14 {offsets = [0, 2], sizes = [2, 2], strides = [1, 1]} : vector<2x4xf32> to vector<2x2xf32>
    %cst_13 = arith.constant 0.000000e+00 : f32
    %17 = vector.broadcast %cst_13 : f32 to vector<2x2xf32>
    %18 = arith.maximumf %16, %17 : vector<2x2xf32>
    %19 = math.absf %16 : vector<2x2xf32>
    %cst_14 = arith.constant 0.000000e+00 : f32
    %20 = vector.broadcast %cst_14 : f32 to vector<2x2xf32>
    %21 = arith.subf %20, %19 : vector<2x2xf32>
    %22 = math.exp %21 : vector<2x2xf32>
    %cst_15 = arith.constant 1.000000e+00 : f32
    %23 = vector.broadcast %cst_15 : f32 to vector<2x2xf32>
    %24 = arith.addf %23, %22 : vector<2x2xf32>
    %25 = math.log %24 : vector<2x2xf32>
    %26 = arith.addf %18, %25 : vector<2x2xf32>
    %cst_16 = arith.constant 0.00999999977 : f32
    %27 = vector.broadcast %cst_16 : f32 to vector<2x2xf32>
    %28 = arith.addf %26, %27 : vector<2x2xf32>
    %29 = math.sqrt %28 : vector<2x2xf32>
    %30 = arith.mulf %29, %1 : vector<2x2xf32>
    %31 = arith.addf %15, %30 : vector<2x2xf32>
    %c0_17 = arith.constant 0 : index
    %c0_18 = arith.constant 0 : index
    %32 = vector.load %arg7[%c0_17, %c0_18] : memref<2x128xf32, #tpu.memory_space<vmem>>, vector<2x128xf32>
    %33 = vector.extract_strided_slice %31 {offsets = [0, 0], sizes = [2, 1], strides = [1, 1]} : vector<2x2xf32> to vector<2x1xf32>
    %34 = vector.extract_strided_slice %32 {offsets = [0, 0], sizes = [1, 128], strides = [1, 1]} : vector<2x128xf32> to vector<1x128xf32>
    %35 = vector.broadcast %33 : vector<2x1xf32> to vector<2x128xf32>
    %36 = vector.broadcast %34 : vector<1x128xf32> to vector<2x128xf32>
    %37 = arith.mulf %35, %36 : vector<2x128xf32>
    %38 = vector.extract_strided_slice %31 {offsets = [0, 1], sizes = [2, 1], strides = [1, 1]} : vector<2x2xf32> to vector<2x1xf32>
    %39 = vector.extract_strided_slice %32 {offsets = [1, 0], sizes = [1, 128], strides = [1, 1]} : vector<2x128xf32> to vector<1x128xf32>
    %40 = vector.broadcast %38 : vector<2x1xf32> to vector<2x128xf32>
    %41 = vector.broadcast %39 : vector<1x128xf32> to vector<2x128xf32>
    %42 = arith.mulf %40, %41 : vector<2x128xf32>
    %43 = arith.addf %37, %42 : vector<2x128xf32>
    %c0_19 = arith.constant 0 : index
    %c0_20 = arith.constant 0 : index
    %44 = vector.load %arg8[%c0_19, %c0_20] : memref<1x128xf32, #tpu.memory_space<vmem>>, vector<1x128xf32>
    %45 = vector.broadcast %44 : vector<1x128xf32> to vector<2x128xf32>
    %46 = arith.addf %43, %45 : vector<2x128xf32>
    %cst_21 = arith.constant 0.000000e+00 : f32
    %47 = vector.broadcast %cst_21 : f32 to vector<2x128xf32>
    %48 = arith.maximumf %46, %47 : vector<2x128xf32>
    %49 = arith.truncf %48 : vector<2x128xf32> to vector<2x128xbf16>
    %c0_22 = arith.constant 0 : index
    %c0_23 = arith.constant 0 : index
    %50 = vector.load %arg9[%c0_22, %c0_23] : memref<128x256xbf16, #tpu.memory_space<vmem>>, vector<128x256xbf16>
    %cst_24 = arith.constant dense<0.000000e+00> : vector<2x256xf32>
    %51 = tpu.matmul %49, %50, %cst_24 {dimension_numbers = #tpu.dot_dimension_numbers<[1], [0], [0], [1], [0, 0, 1, 1], [], []>} : vector<2x128xbf16>, vector<128x256xbf16>, vector<2x256xf32> -> vector<2x256xf32>
    %c0_25 = arith.constant 0 : index
    %c0_26 = arith.constant 0 : index
    %52 = vector.load %arg10[%c0_25, %c0_26] : memref<1x256xf32, #tpu.memory_space<vmem>>, vector<1x256xf32>
    %53 = vector.broadcast %52 : vector<1x256xf32> to vector<2x256xf32>
    %54 = arith.addf %51, %53 : vector<2x256xf32>
    %cst_27 = arith.constant 5.000000e-01 : f32
    %55 = vector.broadcast %cst_27 : f32 to vector<2x256xf32>
    %56 = arith.mulf %55, %54 : vector<2x256xf32>
    %57 = math.tanh %56 : vector<2x256xf32>
    %cst_28 = arith.constant 1.000000e+00 : f32
    %58 = vector.broadcast %cst_28 : f32 to vector<2x256xf32>
    %59 = arith.addf %57, %58 : vector<2x256xf32>
    %cst_29 = arith.constant 5.000000e-01 : f32
    %60 = vector.broadcast %cst_29 : f32 to vector<2x256xf32>
    %61 = arith.mulf %60, %59 : vector<2x256xf32>
    %62 = arith.subf %0, %61 : vector<2x256xf32>
    %63 = arith.mulf %62, %62 : vector<2x256xf32>
    %cst_30 = arith.constant dense<0.000000e+00> : vector<2xf32>
    %64 = vector.multi_reduction <add>, %63, %cst_30 [1] : vector<2x256xf32> to vector<2xf32>
    %65 = vector.shape_cast %64 : vector<2xf32> to vector<2x1xf32>
    %cst_31 = arith.constant -5.000000e-01 : f32
    %66 = vector.broadcast %cst_31 : f32 to vector<2x1xf32>
    %67 = arith.mulf %66, %65 : vector<2x1xf32>
    %cst_32 = arith.constant 235.24826 : f32
    %68 = vector.broadcast %cst_32 : f32 to vector<2x1xf32>
    %69 = arith.subf %67, %68 : vector<2x1xf32>
    %70 = arith.mulf %1, %1 : vector<2x2xf32>
    %cst_33 = arith.constant dense<0.000000e+00> : vector<2xf32>
    %71 = vector.multi_reduction <add>, %70, %cst_33 [1] : vector<2x2xf32> to vector<2xf32>
    %72 = vector.shape_cast %71 : vector<2xf32> to vector<2x1xf32>
    %cst_34 = arith.constant -5.000000e-01 : f32
    %73 = vector.broadcast %cst_34 : f32 to vector<2x1xf32>
    %74 = arith.mulf %73, %72 : vector<2x1xf32>
    %75 = math.log %29 : vector<2x2xf32>
    %cst_35 = arith.constant dense<0.000000e+00> : vector<2xf32>
    %76 = vector.multi_reduction <add>, %75, %cst_35 [1] : vector<2x2xf32> to vector<2xf32>
    %77 = vector.shape_cast %76 : vector<2xf32> to vector<2x1xf32>
    %78 = arith.subf %74, %77 : vector<2x1xf32>
    %cst_36 = arith.constant 1.83787704 : f32
    %79 = vector.broadcast %cst_36 : f32 to vector<2x1xf32>
    %80 = arith.subf %78, %79 : vector<2x1xf32>
    %81 = arith.mulf %31, %31 : vector<2x2xf32>
    %cst_37 = arith.constant dense<0.000000e+00> : vector<2xf32>
    %82 = vector.multi_reduction <add>, %81, %cst_37 [1] : vector<2x2xf32> to vector<2xf32>
    %83 = vector.shape_cast %82 : vector<2xf32> to vector<2x1xf32>
    %cst_38 = arith.constant -5.000000e-01 : f32
    %84 = vector.broadcast %cst_38 : f32 to vector<2x1xf32>
    %85 = arith.mulf %84, %83 : vector<2x1xf32>
    %cst_39 = arith.constant 1.83787704 : f32
    %86 = vector.broadcast %cst_39 : f32 to vector<2x1xf32>
    %87 = arith.subf %85, %86 : vector<2x1xf32>
    %88 = arith.subf %80, %87 : vector<2x1xf32>
    %c0_40 = arith.constant 0 : index
    %c0_41 = arith.constant 0 : index
    %89 = vector.load %arg11[%c0_40, %c0_41] : memref<2x256xf32, #tpu.memory_space<vmem>>, vector<2x256xf32>
    tpu.vector_store %arg11[%c0_40, %c0_41], %61 {strides = array<i32>} : memref<2x256xf32, #tpu.memory_space<vmem>>, vector<2x256xf32>,
    %90 = tpu.concatenate %69, %88, %31, %15, %26 in 1 : vector<2x1xf32>, vector<2x1xf32>, vector<2x2xf32>, vector<2x2xf32>, vector<2x2xf32> -> vector<2x8xf32>
    %c0_42 = arith.constant 0 : index
    %c0_43 = arith.constant 0 : index
    %91 = vector.load %arg12[%c0_42, %c0_43] : memref<2x8xf32, #tpu.memory_space<vmem>>, vector<2x8xf32>
    tpu.vector_store %arg12[%c0_42, %c0_43], %90 {strides = array<i32>} : memref<2x8xf32, #tpu.memory_space<vmem>>, vector<2x8xf32>,
    return
  }
  func.func @transform_0(%arg0: i32) -> (i32, i32) {
    %c0_i32 = arith.constant 0 : i32
    %c0_i32_0 = arith.constant 0 : i32
    return %arg0, %c0_i32 : i32, i32
  }
  func.func @transform_1(%arg0: i32) -> (i32, i32) {
    %c0_i32 = arith.constant 0 : i32
    %c0_i32_0 = arith.constant 0 : i32
    return %arg0, %c0_i32 : i32, i32
  }
  func.func @transform_2(%arg0: i32) -> (i32, i32) {
    %c0_i32 = arith.constant 0 : i32
    %c0_i32_0 = arith.constant 0 : i32
    %c0_i32_1 = arith.constant 0 : i32
    return %c0_i32, %c0_i32_0 : i32, i32
  }
  func.func @transform_3(%arg0: i32) -> (i32, i32) {
    %c0_i32 = arith.constant 0 : i32
    %c0_i32_0 = arith.constant 0 : i32
    %c0_i32_1 = arith.constant 0 : i32
    return %c0_i32, %c0_i32_0 : i32, i32
  }
  func.func @transform_4(%arg0: i32) -> (i32, i32) {
    %c0_i32 = arith.constant 0 : i32
    %c0_i32_0 = arith.constant 0 : i32
    %c0_i32_1 = arith.constant 0 : i32
    return %c0_i32, %c0_i32_0 : i32, i32
  }
  func.func @transform_5(%arg0: i32) -> (i32, i32) {
    %c0_i32 = arith.constant 0 : i32
    %c0_i32_0 = arith.constant 0 : i32
    %c0_i32_1 = arith.constant 0 : i32
    return %c0_i32, %c0_i32_0 : i32, i32
  }
  func.func @transform_6(%arg0: i32) -> (i32, i32) {
    %c0_i32 = arith.constant 0 : i32
    %c0_i32_0 = arith.constant 0 : i32
    %c0_i32_1 = arith.constant 0 : i32
    return %c0_i32, %c0_i32_0 : i32, i32
  }
  func.func @transform_7(%arg0: i32) -> (i32, i32) {
    %c0_i32 = arith.constant 0 : i32
    %c0_i32_0 = arith.constant 0 : i32
    %c0_i32_1 = arith.constant 0 : i32
    return %c0_i32, %c0_i32_0 : i32, i32
  }
  func.func @transform_8(%arg0: i32) -> (i32, i32) {
    %c0_i32 = arith.constant 0 : i32
    %c0_i32_0 = arith.constant 0 : i32
    %c0_i32_1 = arith.constant 0 : i32
    return %c0_i32, %c0_i32_0 : i32, i32
  }
  func.func @transform_9(%arg0: i32) -> (i32, i32) {
    %c0_i32 = arith.constant 0 : i32
    %c0_i32_0 = arith.constant 0 : i32
    %c0_i32_1 = arith.constant 0 : i32
    return %c0_i32, %c0_i32_0 : i32, i32
  }
  func.func @transform_10(%arg0: i32) -> (i32, i32) {
    %c0_i32 = arith.constant 0 : i32
    %c0_i32_0 = arith.constant 0 : i32
    return %arg0, %c0_i32 : i32, i32
  }
  func.func @transform_11(%arg0: i32) -> (i32, i32) {
    %c0_i32 = arith.constant 0 : i32
    %c0_i32_0 = arith.constant 0 : i32
    return %arg0, %c0_i32 : i32, i32
  }
}

</mosaic_0001>

<llo_original>
// kernel: tpu_custom_call.1
$region0: #{tpu_custom_call.1}
  #allocation0 [shape = 'u32[]', space=smem, size = 0x4, offset = 0x4, fixed_abs, tag = 'smem constant byte address 0x4 - core index']
  #allocation1 [shape = 'u32[144,128]{1,0:T(1,128)}', space=vmem, size = 0x12000, scoped, tag = 'internal scratch']
  %s0 = inlined_call_operand.vmem [shape: f32[2,256], index: 0, kind: input, shape index: {}]
  %s1 = inlined_call_operand.vmem [shape: f32[2,2], index: 1, kind: input, shape index: {}]
  %s2 = inlined_call_operand.vmem [shape: bf16[256,128], index: 2, kind: input, shape index: {}]
  %s3 = inlined_call_operand.vmem [shape: f32[1,128], index: 3, kind: input, shape index: {}]
  %s4 = inlined_call_operand.vmem [shape: f32[128,4], index: 4, kind: input, shape index: {}]
  %s5 = inlined_call_operand.vmem [shape: f32[1,4], index: 5, kind: input, shape index: {}]
  %s6 = inlined_call_operand.vmem [shape: f32[2,128], index: 6, kind: input, shape index: {}]
  %s7 = inlined_call_operand.vmem [shape: f32[1,128], index: 7, kind: input, shape index: {}]
  %s8 = inlined_call_operand.hbm [shape: bf16[128,256], index: 8, kind: input, shape index: {}]
  %s9 = inlined_call_operand.vmem [shape: f32[1,256], index: 9, kind: input, shape index: {}]
  %s10 = inlined_call_operand.hbm [shape: f32[2,256], index: 10, kind: output, shape index: {0}]
  %s11 = inlined_call_operand.hbm [shape: f32[2,8], index: 11, kind: output, shape index: {1}]
  %12 = xla_tuple %s10, %s11
  %s13 = sld [smem:[#allocation0]]
  $region62: #{tpu_custom_call.1} parent=0
    _
  %s15 = ssub.s32 1, %s13
  %s16 = scalar_select 0, %s15, %s13
  $region1: #{tpu_custom_call.1} parent=0
    #allocation2 [shape = 'u8[65536]{0}', space=vmem, size = 0x10000, scoped, tag = 'input window, operand 8, single buffered']
    #allocation3 [shape = 's32[1]{0}', space=sflag, size = 0x4, scoped, tag = 'scoped memory for tpu_custom_call.1']
    #allocation4 [shape = 's32[1]{0}', space=sflag, size = 0x4, scoped, tag = 'scoped memory for tpu_custom_call.1']
    #allocation5 [shape = 'u8[2048]{0}', space=vmem, size = 0x800, scoped, tag = 'output window, operand 0, single buffered']
    #allocation6 [shape = 'u8[1024]{0}', space=vmem, size = 0x400, scoped, tag = 'output window, operand 1, single buffered']
    #allocation7 [shape = 's32[1]{0}', space=sflag, size = 0x4, scoped, tag = 'scoped memory for tpu_custom_call.1']
    %17 = vsyncpa [#allocation3], 0
    %18 = vsyncpa [#allocation4], 0
    %19 = vsyncpa [#allocation7], 0
    // Predicated region
    $region2: #{tpu_custom_call.1} parent=1 // pred_check
      _
    $region3: #{tpu_custom_call.1} parent=1 // pred_check_branch
      %21 = sbr.rel (0) target = $region5
    $region4: #{tpu_custom_call.1} parent=1 // pred_region
      _
    $region5: #{tpu_custom_call.1} parent=1 // pred_fallthru
      _
    // Predicated region
    $region6: #{tpu_custom_call.1} parent=1 // pred_check
      _
    $region7: #{tpu_custom_call.1} parent=1 // pred_check_branch
      %23 = sbr.rel (0) target = $region9
    $region8: #{tpu_custom_call.1} parent=1 // pred_region
      _
    $region9: #{tpu_custom_call.1} parent=1 // pred_fallthru
      _
    // Predicated region
    $region10: #{tpu_custom_call.1} parent=1 // pred_check
      _
    $region11: #{tpu_custom_call.1} parent=1 // pred_check_branch
      %25 = sbr.rel (0) target = $region13
    $region12: #{tpu_custom_call.1} parent=1 // pred_region
      _
    $region13: #{tpu_custom_call.1} parent=1 // pred_fallthru
      _
    // Predicated region
    $region14: #{tpu_custom_call.1} parent=1 // pred_check
      _
    $region15: #{tpu_custom_call.1} parent=1 // pred_check_branch
      %27 = sbr.rel (0) target = $region17
    $region16: #{tpu_custom_call.1} parent=1 // pred_region
      _
    $region17: #{tpu_custom_call.1} parent=1 // pred_fallthru
      _
    // Predicated region
    $region18: #{tpu_custom_call.1} parent=1 // pred_check
      _
    $region19: #{tpu_custom_call.1} parent=1 // pred_check_branch
      %29 = sbr.rel (0) target = $region21
    $region20: #{tpu_custom_call.1} parent=1 // pred_region
      _
    $region21: #{tpu_custom_call.1} parent=1 // pred_fallthru
      _
    // Predicated region
    $region22: #{tpu_custom_call.1} parent=1 // pred_check
      _
    $region23: #{tpu_custom_call.1} parent=1 // pred_check_branch
      %31 = sbr.rel (0) target = $region25
    $region24: #{tpu_custom_call.1} parent=1 // pred_region
      _
    $region25: #{tpu_custom_call.1} parent=1 // pred_fallthru
      _
    // Predicated region
    $region26: #{tpu_custom_call.1} parent=1 // pred_check
      _
    $region27: #{tpu_custom_call.1} parent=1 // pred_check_branch
      %33 = sbr.rel (0) target = $region29
    $region28: #{tpu_custom_call.1} parent=1 // pred_region
      _
    $region29: #{tpu_custom_call.1} parent=1 // pred_fallthru
      _
    // Predicated region
    $region30: #{tpu_custom_call.1} parent=1 // pred_check
      _
    $region31: #{tpu_custom_call.1} parent=1 // pred_check_branch
      %35 = sbr.rel (0) target = $region33
    $region32: #{tpu_custom_call.1} parent=1 // pred_region
      _
    $region33: #{tpu_custom_call.1} parent=1 // pred_fallthru
      _
    // Predicated region
    $region34: #{tpu_custom_call.1} parent=1 // pred_check
      _
    $region35: #{tpu_custom_call.1} parent=1 // pred_check_branch
      %37 = sbr.rel (0) target = $region37
    $region36: #{tpu_custom_call.1} parent=1 // pred_region
      %s39 = ssub.s32 2048, 2048
      %40 = vsyncadd [#allocation3], %s39
      %s41 = sshll.u32 [#allocation2], 4
      %s42 = int_to_ptr.vmem [resolvable:$true] %s41
      %47 = dma.hbm_to_vmem [thread:$0]  %s8, 2048, %s42, [#allocation3], 128, 128, 8
    $region37: #{tpu_custom_call.1} parent=1 // pred_fallthru
      _
    // Predicated region
    $region38: #{tpu_custom_call.1} parent=1 // pred_check
      _
    $region39: #{tpu_custom_call.1} parent=1 // pred_check_branch
      %49 = sbr.rel (0) target = $region41
    $region40: #{tpu_custom_call.1} parent=1 // pred_region
      _
    $region41: #{tpu_custom_call.1} parent=1 // pred_fallthru
      _
    // Predicated region
    $region42: #{tpu_custom_call.1} parent=1 // pred_check
      _
    $region43: #{tpu_custom_call.1} parent=1 // pred_check_branch
      %51 = sbr.rel (0) target = $region45
    $region44: #{tpu_custom_call.1} parent=1 // pred_region
      %52 = dma.done [#allocation3], 2048
    $region45: #{tpu_custom_call.1} parent=1 // pred_fallthru
      _
    %v54 = vld [vmem:[%s0] sm:$0xf]
    %v55 = vld [vmem:[%s1] sm:$0x3]
    %v58 = vunpack.c.l.s4 1983009808
    %v59 = vunpack.c.0.s8 %v58
    %v60 = vlaneseq
    %v61 = vshrl.u32 %v60, 7
    %v62 = vsub.s32 %v59, %v61
    %v63 = vrot.slane %v54, %v62
    %v64 = vcombine.high %v63, %v63
    %v67 = vpack.c.bf16 %v63, %v63
    %v68 = vpack.c.bf16 %v64, %v64
    %v69 = vld [vmem:[%s2] sm:$0xf]
    %v70 = vld [vmem:[%s2 + $0x4] sm:$0xf]
    %v71 = vld [vmem:[%s2 + $0x8] sm:$0xf]
    %v72 = vld [vmem:[%s2 + $0xc] sm:$0xf]
    %v73 = vld [vmem:[%s2 + $0x10] sm:$0xf]
    %v74 = vld [vmem:[%s2 + $0x14] sm:$0xf]
    %v75 = vld [vmem:[%s2 + $0x18] sm:$0xf]
    %v76 = vld [vmem:[%s2 + $0x1c] sm:$0xf]
    %v77 = vld [vmem:[%s2 + $0x20] sm:$0xf]
    %v78 = vld [vmem:[%s2 + $0x24] sm:$0xf]
    %v79 = vld [vmem:[%s2 + $0x28] sm:$0xf]
    %v80 = vld [vmem:[%s2 + $0x2c] sm:$0xf]
    %v81 = vld [vmem:[%s2 + $0x30] sm:$0xf]
    %v82 = vld [vmem:[%s2 + $0x34] sm:$0xf]
    %v83 = vld [vmem:[%s2 + $0x38] sm:$0xf]
    %v84 = vld [vmem:[%s2 + $0x3c] sm:$0xf]
    %v85 = vld [vmem:[%s2 + $0x40] sm:$0xf]
    %v86 = vld [vmem:[%s2 + $0x44] sm:$0xf]
    %v87 = vld [vmem:[%s2 + $0x48] sm:$0xf]
    %v88 = vld [vmem:[%s2 + $0x4c] sm:$0xf]
    %v89 = vld [vmem:[%s2 + $0x50] sm:$0xf]
    %v90 = vld [vmem:[%s2 + $0x54] sm:$0xf]
    %v91 = vld [vmem:[%s2 + $0x58] sm:$0xf]
    %v92 = vld [vmem:[%s2 + $0x5c] sm:$0xf]
    %v93 = vld [vmem:[%s2 + $0x60] sm:$0xf]
    %v94 = vld [vmem:[%s2 + $0x64] sm:$0xf]
    %v95 = vld [vmem:[%s2 + $0x68] sm:$0xf]
    %v96 = vld [vmem:[%s2 + $0x6c] sm:$0xf]
    %v97 = vld [vmem:[%s2 + $0x70] sm:$0xf]
    %v98 = vld [vmem:[%s2 + $0x74] sm:$0xf]
    %v99 = vld [vmem:[%s2 + $0x78] sm:$0xf]
    %v100 = vld [vmem:[%s2 + $0x7c] sm:$0xf]
    %v101 = vld [vmem:[%s3] sm:$0x1]
    %v103 = vlaneseq
    %v104 = vshrl.u32 %v103, 7
    %v105 = vsub.s32 0, %v104
    %v106 = vrot.slane %v101, %v105
    %v140 = vunpack.c.l.b16 %v69
    %v141 = vunpack.c.l.b16 %v70
    %v142 = vunpack.c.l.b16 %v71
    %v143 = vunpack.c.l.b16 %v72
    %v144 = vunpack.c.l.b16 %v73
    %v145 = vunpack.c.l.b16 %v74
    %v146 = vunpack.c.l.b16 %v75
    %v147 = vunpack.c.l.b16 %v76
    %v148 = vunpack.c.l.b16 %v77
    %v149 = vunpack.c.l.b16 %v78
    %v150 = vunpack.c.l.b16 %v79
    %v151 = vunpack.c.l.b16 %v80
    %v152 = vunpack.c.l.b16 %v81
    %v153 = vunpack.c.l.b16 %v82
    %v154 = vunpack.c.l.b16 %v83
    %v155 = vunpack.c.l.b16 %v84
    %v156 = vunpack.c.l.b16 %v85
    %v157 = vunpack.c.l.b16 %v86
    %v158 = vunpack.c.l.b16 %v87
    %v159 = vunpack.c.l.b16 %v88
    %v160 = vunpack.c.l.b16 %v89
    %v161 = vunpack.c.l.b16 %v90
    %v162 = vunpack.c.l.b16 %v91
    %v163 = vunpack.c.l.b16 %v92
    %v164 = vunpack.c.l.b16 %v93
    %v165 = vunpack.c.l.b16 %v94
    %v166 = vunpack.c.l.b16 %v95
    %v167 = vunpack.c.l.b16 %v96
    %v168 = vunpack.c.l.b16 %v97
    %v169 = vunpack.c.l.b16 %v98
    %v170 = vunpack.c.l.b16 %v99
    %v171 = vunpack.c.l.b16 %v100
    %v172 = vpack.c.b16 %v141, %v140
    %v173 = vpack.c.b16 %v143, %v142
    %v174 = vpack.c.b16 %v145, %v144
    %v175 = vpack.c.b16 %v147, %v146
    %v176 = vpack.c.b16 %v149, %v148
    %v177 = vpack.c.b16 %v151, %v150
    %v178 = vpack.c.b16 %v153, %v152
    %v179 = vpack.c.b16 %v155, %v154
    %v180 = vpack.c.b16 %v157, %v156
    %v181 = vpack.c.b16 %v159, %v158
    %v182 = vpack.c.b16 %v161, %v160
    %v183 = vpack.c.b16 %v163, %v162
    %v184 = vpack.c.b16 %v165, %v164
    %v185 = vpack.c.b16 %v167, %v166
    %v186 = vpack.c.b16 %v169, %v168
    %v187 = vpack.c.b16 %v171, %v170
    %204 = vmatprep.subr.bf16.mxu0 0
    %205 = vmatpush1.bf16.msra.mxu0 %v172
    %206 = vmatprep.subr.bf16.mxu0 0
    %207 = vmatpush1.bf16.msra.mxu0 %v173
    %208 = vmatprep.subr.bf16.mxu0 0
    %209 = vmatpush1.bf16.msra.mxu0 %v174
    %210 = vmatprep.subr.bf16.mxu0 0
    %211 = vmatpush1.bf16.msra.mxu0 %v175
    %212 = vmatprep.subr.bf16.mxu0 0
    %213 = vmatpush1.bf16.msra.mxu0 %v176
    %214 = vmatprep.subr.bf16.mxu0 0
    %215 = vmatpush1.bf16.msra.mxu0 %v177
    %216 = vmatprep.subr.bf16.mxu0 0
    %217 = vmatpush1.bf16.msra.mxu0 %v178
    %218 = vmatprep.subr.bf16.mxu0 0
    %219 = vmatpush1.bf16.msra.mxu0 %v179
    %220 = vmatprep.subr.bf16.mxu0 0
    %221 = vmatpush1.bf16.msra.mxu0 %v180
    %222 = vmatprep.subr.bf16.mxu0 0
    %223 = vmatpush1.bf16.msra.mxu0 %v181
    %224 = vmatprep.subr.bf16.mxu0 0
    %225 = vmatpush1.bf16.msra.mxu0 %v182
    %226 = vmatprep.subr.bf16.mxu0 0
    %227 = vmatpush1.bf16.msra.mxu0 %v183
    %228 = vmatprep.subr.bf16.mxu0 0
    %229 = vmatpush1.bf16.msra.mxu0 %v184
    %230 = vmatprep.subr.bf16.mxu0 0
    %231 = vmatpush1.bf16.msra.mxu0 %v185
    %232 = vmatprep.subr.bf16.mxu0 0
    %233 = vmatpush1.bf16.msra.mxu0 %v186
    %234 = vmatprep.subr.bf16.mxu0 0
    %235 = vmatpush1.bf16.msra.mxu0 %v187
    %236 = vmatprep.mubr.bf16.mxu0 %v68
    %237 = vmatmul.mubr.bf16.gmra.mrb[0].mxu0 %v67
    %v238 = vpop.f32.mrb[0].mxu0
    %v239 = vadd.f32 %v106, %v238
    %v240 = vpop.f32.mrb[0].mxu0
    %v241 = vpop.f32.mrb[0].mxu0
    %v242 = vpop.f32.mrb[0].mxu0
    %243 = vdwg.mxu0
    %v244 = vmax.f32 %v239, 0.0
    %v245 = vld [vmem:[%s4] sm:$0xff]
    %v246 = vld [vmem:[%s4 + $0x8] sm:$0xff]
    %v247 = vld [vmem:[%s4 + $0x10] sm:$0xff]
    %v248 = vld [vmem:[%s4 + $0x18] sm:$0xff]
    %v249 = vld [vmem:[%s4 + $0x20] sm:$0xff]
    %v250 = vld [vmem:[%s4 + $0x28] sm:$0xff]
    %v251 = vld [vmem:[%s4 + $0x30] sm:$0xff]
    %v252 = vld [vmem:[%s4 + $0x38] sm:$0xff]
    %v253 = vld [vmem:[%s4 + $0x40] sm:$0xff]
    %v254 = vld [vmem:[%s4 + $0x48] sm:$0xff]
    %v255 = vld [vmem:[%s4 + $0x50] sm:$0xff]
    %v256 = vld [vmem:[%s4 + $0x58] sm:$0xff]
    %v257 = vld [vmem:[%s4 + $0x60] sm:$0xff]
    %v258 = vld [vmem:[%s4 + $0x68] sm:$0xff]
    %v259 = vld [vmem:[%s4 + $0x70] sm:$0xff]
    %v260 = vld [vmem:[%s4 + $0x78] sm:$0xff]
    %v261 = vld [vmem:[%s5] sm:$0x1]
    %v263 = vlaneseq
    %v264 = vshrl.u32 %v263, 7
    %v265 = vsub.s32 0, %v264
    %v266 = vrot.slane %v261, %v265
    %268 = vmatprep.subr.mxu0 0.0
    %269 = vmatpush1.msra.mxu0 %v245
    %270 = vmatprep.subr.mxu0 0.0
    %271 = vmatpush1.msra.mxu0 %v246
    %272 = vmatprep.subr.mxu0 0.0
    %273 = vmatpush1.msra.mxu0 %v247
    %274 = vmatprep.subr.mxu0 0.0
    %275 = vmatpush1.msra.mxu0 %v248
    %276 = vmatprep.subr.mxu0 0.0
    %277 = vmatpush1.msra.mxu0 %v249
    %278 = vmatprep.subr.mxu0 0.0
    %279 = vmatpush1.msra.mxu0 %v250
    %280 = vmatprep.subr.mxu0 0.0
    %281 = vmatpush1.msra.mxu0 %v251
    %282 = vmatprep.subr.mxu0 0.0
    %283 = vmatpush1.msra.mxu0 %v252
    %284 = vmatprep.subr.mxu0 0.0
    %285 = vmatpush1.msra.mxu0 %v253
    %286 = vmatprep.subr.mxu0 0.0
    %287 = vmatpush1.msra.mxu0 %v254
    %288 = vmatprep.subr.mxu0 0.0
    %289 = vmatpush1.msra.mxu0 %v255
    %290 = vmatprep.subr.mxu0 0.0
    %291 = vmatpush1.msra.mxu0 %v256
    %292 = vmatprep.subr.mxu0 0.0
    %293 = vmatpush1.msra.mxu0 %v257
    %294 = vmatprep.subr.mxu0 0.0
    %295 = vmatpush1.msra.mxu0 %v258
    %296 = vmatprep.subr.mxu0 0.0
    %297 = vmatpush1.msra.mxu0 %v259
    %298 = vmatprep.subr.mxu0 0.0
    %299 = vmatpush1.msra.mxu0 %v260
    %300 = vmatprep.subr.mxu0 0.0
    %301 = vmatpush1.msra.mxu0 0.0
    %302 = vmatprep.subr.mxu0 0.0
    %303 = vmatpush1.msra.mxu0 0.0
    %304 = vmatprep.subr.mxu0 0.0
    %305 = vmatpush1.msra.mxu0 0.0
    %306 = vmatprep.subr.mxu0 0.0
    %307 = vmatpush1.msra.mxu0 0.0
    %308 = vmatprep.subr.mxu0 0.0
    %309 = vmatpush1.msra.mxu0 0.0
    %310 = vmatprep.subr.mxu0 0.0
    %311 = vmatpush1.msra.mxu0 0.0
    %312 = vmatprep.subr.mxu0 0.0
    %313 = vmatpush1.msra.mxu0 0.0
    %314 = vmatprep.subr.mxu0 0.0
    %315 = vmatpush1.msra.mxu0 0.0
    %316 = vmatprep.subr.mxu0 0.0
    %317 = vmatpush1.msra.mxu0 0.0
    %318 = vmatprep.subr.mxu0 0.0
    %319 = vmatpush1.msra.mxu0 0.0
    %320 = vmatprep.subr.mxu0 0.0
    %321 = vmatpush1.msra.mxu0 0.0
    %322 = vmatprep.subr.mxu0 0.0
    %323 = vmatpush1.msra.mxu0 0.0
    %324 = vmatprep.subr.mxu0 0.0
    %325 = vmatpush1.msra.mxu0 0.0
    %326 = vmatprep.subr.mxu0 0.0
    %327 = vmatpush1.msra.mxu0 0.0
    %328 = vmatprep.subr.mxu0 0.0
    %329 = vmatpush1.msra.mxu0 0.0
    %330 = vmatprep.subr.mxu0 0.0
    %331 = vmatpush1.msra.mxu0 0.0
    %332 = vmatprep.mubr.f32.mxu0 0.0
    %333 = vmatmul.mubr.f32.gmra.mrb[0].mxu0 %v244
    %v334 = vpop.f32.mrb[0].mxu0
    %v335 = vadd.f32 %v266, %v334
    %v336 = vpop.f32.mrb[0].mxu0
    %337 = vdwg.mxu0
    %v338 = vmax.f32 %v335, 0.0
    %v339 = vand.u32 2147483647, %v335
    %v340 = vsub.f32 0.0, %v339
    %v341 = vmul.f32 %v340, 1.442695
    %v342 = vpow.pop %v341
    %v343 = vadd.f32 %v342, 1.0
    %v344 = vlog2.pop %v343
    %v345 = vmul.f32 %v344, 0.6931472
    %v346 = vadd.f32 %v338, %v345
    %v347 = vadd.f32 %v346, 0.01
    %v348 = vrsqrt.pop %v347
    %v349 = vmul.f32 %v347, %v348
    %vm350 = vcmp.eq.f32.partialorder %v347, inf
    %v351 = vsel %vm350, %v347, %v349
    %vm352 = vcmp.eq.f32.partialorder %v347, 0.0
    %v353 = vand.u32 %v347, 2147483648
    %v354 = vsel %vm352, %v353, %v351
    %356 = vrot.lane.b32.xlu0 %v55, 2
    %v357 = vpop.permute.xlu0 %356
    %v359 = vmul.f32 %v354, %v357
    %361 = vrot.lane.b32.xlu0 %v359, 126
    %v362 = vpop.permute.xlu0 %361
    %v364 = vadd.f32 %v335, %v362
    %v365 = vld [vmem:[%s6] sm:$0x3]
    %367 = vset.pattern.permute.xlu0 0
    %368 = vperm.xlu0 %367, %v364
    %v369 = vpop.permute.xlu0 %368
    %v371 = vlaneseq
    %v372 = vshrl.u32 %v371, 7
    %v373 = vsub.s32 0, %v372
    %v374 = vrot.slane %v365, %v373
    %v375 = vmul.f32 %v369, %v374
    %376 = vset.pattern.permute.xlu0 1
    %377 = vperm.xlu0 %376, %v364
    %v378 = vpop.permute.xlu0 %377
    %v380 = vlaneseq
    %v381 = vshrl.u32 %v380, 7
    %v382 = vsub.s32 1, %v381
    %v383 = vrot.slane %v365, %v382
    %v384 = vmul.f32 %v378, %v383
    %v385 = vadd.f32 %v375, %v384
    %v386 = vld [vmem:[%s7] sm:$0x1]
    %v388 = vlaneseq
    %v389 = vshrl.u32 %v388, 7
    %v390 = vsub.s32 0, %v389
    %v391 = vrot.slane %v386, %v390
    %v393 = vadd.f32 %v385, %v391
    %v394 = vmax.f32 %v393, 0.0
    %v395 = vpack.c.bf16 %v394, %v394
    %v396 = vld [vmem:[#allocation2] sm:$0xff]
    %v397 = vld [vmem:[#allocation2 + $0x8] sm:$0xff]
    %v398 = vld [vmem:[#allocation2 + $0x10] sm:$0xff]
    %v399 = vld [vmem:[#allocation2 + $0x18] sm:$0xff]
    %v400 = vld [vmem:[#allocation2 + $0x20] sm:$0xff]
    %v401 = vld [vmem:[#allocation2 + $0x28] sm:$0xff]
    %v402 = vld [vmem:[#allocation2 + $0x30] sm:$0xff]
    %v403 = vld [vmem:[#allocation2 + $0x38] sm:$0xff]
    %v404 = vld [vmem:[#allocation2 + $0x40] sm:$0xff]
    %v405 = vld [vmem:[#allocation2 + $0x48] sm:$0xff]
    %v406 = vld [vmem:[#allocation2 + $0x50] sm:$0xff]
    %v407 = vld [vmem:[#allocation2 + $0x58] sm:$0xff]
    %v408 = vld [vmem:[#allocation2 + $0x60] sm:$0xff]
    %v409 = vld [vmem:[#allocation2 + $0x68] sm:$0xff]
    %v410 = vld [vmem:[#allocation2 + $0x70] sm:$0xff]
    %v411 = vld [vmem:[#allocation2 + $0x78] sm:$0xff]
    %v412 = vld [vmem:[%s9] sm:$0x3]
    %v414 = vlaneseq
    %v415 = vshrl.u32 %v414, 7
    %v416 = vsub.s32 0, %v415
    %v417 = vrot.slane %v412, %v416
    %v418 = vlaneseq
    %v419 = vshrl.u32 %v418, 7
    %v420 = vsub.s32 1, %v419
    %v421 = vrot.slane %v412, %v420
    %v440 = vunpack.c.l.b16 %v396
    %v441 = vunpack.c.h.b16 %v396
    %v442 = vunpack.c.l.b16 %v397
    %v443 = vunpack.c.h.b16 %v397
    %v444 = vunpack.c.l.b16 %v398
    %v445 = vunpack.c.h.b16 %v398
    %v446 = vunpack.c.l.b16 %v399
    %v447 = vunpack.c.h.b16 %v399
    %v448 = vunpack.c.l.b16 %v400
    %v449 = vunpack.c.h.b16 %v400
    %v450 = vunpack.c.l.b16 %v401
    %v451 = vunpack.c.h.b16 %v401
    %v452 = vunpack.c.l.b16 %v402
    %v453 = vunpack.c.h.b16 %v402
    %v454 = vunpack.c.l.b16 %v403
    %v455 = vunpack.c.h.b16 %v403
    %v456 = vunpack.c.l.b16 %v404
    %v457 = vunpack.c.h.b16 %v404
    %v458 = vunpack.c.l.b16 %v405
    %v459 = vunpack.c.h.b16 %v405
    %v460 = vunpack.c.l.b16 %v406
    %v461 = vunpack.c.h.b16 %v406
    %v462 = vunpack.c.l.b16 %v407
    %v463 = vunpack.c.h.b16 %v407
    %v464 = vunpack.c.l.b16 %v408
    %v465 = vunpack.c.h.b16 %v408
    %v466 = vunpack.c.l.b16 %v409
    %v467 = vunpack.c.h.b16 %v409
    %v468 = vunpack.c.l.b16 %v410
    %v469 = vunpack.c.h.b16 %v410
    %v470 = vunpack.c.l.b16 %v411
    %v471 = vunpack.c.h.b16 %v411
    %v472 = vpack.c.b16 %v442, %v440
    %v473 = vpack.c.b16 %v443, %v441
    %v474 = vpack.c.b16 %v446, %v444
    %v475 = vpack.c.b16 %v447, %v445
    %v476 = vpack.c.b16 %v450, %v448
    %v477 = vpack.c.b16 %v451, %v449
    %v478 = vpack.c.b16 %v454, %v452
    %v479 = vpack.c.b16 %v455, %v453
    %v480 = vpack.c.b16 %v458, %v456
    %v481 = vpack.c.b16 %v459, %v457
    %v482 = vpack.c.b16 %v462, %v460
    %v483 = vpack.c.b16 %v463, %v461
    %v484 = vpack.c.b16 %v466, %v464
    %v485 = vpack.c.b16 %v467, %v465
    %v486 = vpack.c.b16 %v470, %v468
    %v487 = vpack.c.b16 %v471, %v469
    %504 = vmatprep.subr.bf16.mxu0 %v473
    %505 = vmatpush1.bf16.msra.mxu0 %v472
    %506 = vmatprep.subr.bf16.mxu0 %v475
    %507 = vmatpush1.bf16.msra.mxu0 %v474
    %508 = vmatprep.subr.bf16.mxu0 %v477
    %509 = vmatpush1.bf16.msra.mxu0 %v476
    %510 = vmatprep.subr.bf16.mxu0 %v479
    %511 = vmatpush1.bf16.msra.mxu0 %v478
    %512 = vmatprep.subr.bf16.mxu0 %v481
    %513 = vmatpush1.bf16.msra.mxu0 %v480
    %514 = vmatprep.subr.bf16.mxu0 %v483
    %515 = vmatpush1.bf16.msra.mxu0 %v482
    %516 = vmatprep.subr.bf16.mxu0 %v485
    %517 = vmatpush1.bf16.msra.mxu0 %v484
    %518 = vmatprep.subr.bf16.mxu0 %v487
    %519 = vmatpush1.bf16.msra.mxu0 %v486
    %520 = vmatprep.subr.bf16.mxu0 0
    %521 = vmatpush1.bf16.msra.mxu0 0
    %522 = vmatprep.subr.bf16.mxu0 0
    %523 = vmatpush1.bf16.msra.mxu0 0
    %524 = vmatprep.subr.bf16.mxu0 0
    %525 = vmatpush1.bf16.msra.mxu0 0
    %526 = vmatprep.subr.bf16.mxu0 0
    %527 = vmatpush1.bf16.msra.mxu0 0
    %528 = vmatprep.subr.bf16.mxu0 0
    %529 = vmatpush1.bf16.msra.mxu0 0
    %530 = vmatprep.subr.bf16.mxu0 0
    %531 = vmatpush1.bf16.msra.mxu0 0
    %532 = vmatprep.subr.bf16.mxu0 0
    %533 = vmatpush1.bf16.msra.mxu0 0
    %534 = vmatprep.subr.bf16.mxu0 0
    %535 = vmatpush1.bf16.msra.mxu0 0
    %536 = vmatprep.mubr.bf16.mxu0 0
    %537 = vmatmul.mubr.bf16.gmra.mrb[0].mxu0 %v395
    %v538 = vpop.f32.mrb[0].mxu0
    %v539 = vadd.f32 %v417, %v538
    %v540 = vpop.f32.mrb[0].mxu0
    %v541 = vadd.f32 %v421, %v540
    %v542 = vpop.f32.mrb[0].mxu0
    %v543 = vpop.f32.mrb[0].mxu0
    %544 = vdwg.mxu0
    %v545 = vmul.f32 %v539, 0.5
    %v546 = vmul.f32 %v541, 0.5
    %v547 = vtanh.pop %v545
    %v548 = vtanh.pop %v546
    %v549 = vadd.f32 %v547, 1.0
    %v550 = vadd.f32 %v548, 1.0
    %v551 = vmul.f32 %v549, 0.5
    %v552 = vmul.f32 %v550, 0.5
    %v555 = vcombine.low %v551, %v552
    %v557 = vunpack.c.l.s4 1983009808
    %v558 = vunpack.c.0.s8 %v557
    %v559 = vlaneseq
    %v560 = vshrl.u32 %v559, 7
    %v561 = vsub.s32 %v558, %v560
    %v562 = vrot.slane %v555, %v561
    %v564 = vsub.f32 %v54, %v562
    %v565 = vmul.f32 %v564, %v564
    %v568 = vunpack.c.l.s4 1983009808
    %v569 = vunpack.c.0.s8 %v568
    %v570 = vlaneseq
    %v571 = vshrl.u32 %v570, 7
    %v572 = vsub.s32 %v569, %v571
    %v573 = vrot.slane %v565, %v572
    %v574 = vcombine.high %v573, %v573
    %vm577 = vcmask 1041408
    %v578 = vsel %vm577, %v573, 0.0
    %v579 = vsel %vm577, %v574, 0.0
    %v580 = vadd.f32 %v578, %v579
    %581 = vadd.xlane.f32.xlu0 %v580
    %v582 = vpop.xlane.xlu0 %581
    %v583 = vmul.f32 %v582, -0.5
    %v584 = vsub.f32 %v583, 235.24826
    %v585 = vmul.f32 %v55, %v55
    %vm586 = vcmask 9216
    %v587 = vsel %vm586, %v585, 0.0
    %588 = vadd.xlane.f32.xlu0 %v587
    %v589 = vpop.xlane.xlu0 %588
    %v590 = vmul.f32 %v589, -0.5
    %v591 = vlog2.pop %v354
    %v592 = vmul.f32 %v591, 0.6931472
    %594 = vrot.lane.b32.xlu0 %v592, 126
    %v595 = vpop.permute.xlu0 %594
    %v597 = vsel %vm586, %v595, 0.0
    %598 = vadd.xlane.f32.xlu0 %v597
    %v599 = vpop.xlane.xlu0 %598
    %v600 = vsub.f32 %v590, %v599
    %v601 = vsub.f32 %v600, 1.837877
    %v602 = vmul.f32 %v364, %v364
    %v603 = vsel %vm586, %v602, 0.0
    %604 = vadd.xlane.f32.xlu0 %v603
    %v605 = vpop.xlane.xlu0 %604
    %v606 = vmul.f32 %v605, -0.5
    %v607 = vsub.f32 %v606, 1.837877
    %v608 = vsub.f32 %v601, %v607
    %609 = vst [vmem:[#allocation5] sm:$0xf] %v562
    %610 = vrot.lane.b32.xlu0 %v364, 2
    %v611 = vpop.permute.xlu0 %610
    %614 = vrot.lane.b32.xlu0 %v335, 4
    %v615 = vpop.permute.xlu0 %614
    %618 = vrot.lane.b32.xlu0 %v346, 4
    %v619 = vpop.permute.xlu0 %618
    %vm621 = vcmask 7168
    %v622 = vsel %vm621, %v584, %v608
    %vm623 = vcmask 15360
    %v624 = vsel %vm623, %v622, %v611
    %vm625 = vcmask 31744
    %v626 = vsel %vm625, %v624, %v615
    %vm627 = vcmask 48128
    %v628 = vsel %vm627, %v626, %v619
    %vm629 = vcmask 58368
    %630 = vst.msk [vmem:[#allocation6] sm:$0x3] %vm629, %v628
    // Predicated region
    $region46: #{tpu_custom_call.1} parent=1 // pred_check
      _
    $region47: #{tpu_custom_call.1} parent=1 // pred_check_branch
      %632 = sbr.rel (0) target = $region49
    $region48: #{tpu_custom_call.1} parent=1 // pred_region
      %s634 = ssub.s32 64, 64
      %635 = vsyncadd [#allocation4], %s634
      %s637 = sshll.u32 [#allocation5], 4
      %s638 = int_to_ptr.vmem [resolvable:$true] %s637
      %640 = dma.vmem_to_hbm [thread:$0]  %s638, 64, %s10, [#allocation4]
    $region49: #{tpu_custom_call.1} parent=1 // pred_fallthru
      _
    // Predicated region
    $region50: #{tpu_custom_call.1} parent=1 // pred_check
      _
    $region51: #{tpu_custom_call.1} parent=1 // pred_check_branch
      %642 = sbr.rel (0) target = $region53
    $region52: #{tpu_custom_call.1} parent=1 // pred_region
      %s644 = ssub.s32 32, 32
      %645 = vsyncadd [#allocation7], %s644
      %s647 = sshll.u32 [#allocation6], 4
      %s648 = int_to_ptr.vmem [resolvable:$true] %s647
      %650 = dma.vmem_to_hbm [thread:$0]  %s648, 32, %s11, [#allocation7]
    $region53: #{tpu_custom_call.1} parent=1 // pred_fallthru
      _
    // Predicated region
    $region54: #{tpu_custom_call.1} parent=1 // pred_check
      _
    $region55: #{tpu_custom_call.1} parent=1 // pred_check_branch
      %652 = sbr.rel (0) target = $region57
    $region56: #{tpu_custom_call.1} parent=1 // pred_region
      %653 = dma.done [#allocation4], 64
    $region57: #{tpu_custom_call.1} parent=1 // pred_fallthru
      _
    // Predicated region
    $region58: #{tpu_custom_call.1} parent=1 // pred_check
      _
    $region59: #{tpu_custom_call.1} parent=1 // pred_check_branch
      %655 = sbr.rel (0) target = $region61
    $region60: #{tpu_custom_call.1} parent=1 // pred_region
      %656 = dma.done [#allocation7], 32
    $region61: #{tpu_custom_call.1} parent=1 // pred_fallthru
      _
    %657 = vsyncpa [#allocation3], 1
    %658 = vsyncpa [#allocation4], 1
    %659 = vsyncpa [#allocation7], 1

</llo_original>
